<compile_context>
chip_gen: v7x
topology: tpu7x:2x2x1
jax: 0.10.0
libtpu: 0.0.40
codegen_flags: <defaults>
</compile_context>

<pallas_src>
import jax
import jax.numpy as jnp
from jax.experimental import pallas as pl
from jax.experimental.pallas import tpu as pltpu


def mlp_sonar_kernel(x_ref, w1_ref, b1_ref, w2_ref, b2_ref, o_ref):
    # x arrives as f32 straight from HBM; cast to bf16 on the VPU just before
    # the MXU (numerically identical to a wrapper-side cast, but free).
    x_bf = x_ref[...].astype(jnp.bfloat16)
    # Layer 1 on the MXU, f32 accumulation.
    h = jnp.dot(x_bf, w1_ref[...], preferred_element_type=jnp.float32)
    # Bias + ReLU in f32 on the VPU.
    h = jnp.maximum(h + b1_ref[...], 0.0)
    # Layer 2: activations cast to bf16 only for the MXU pass.
    y = jnp.dot(h.astype(jnp.bfloat16), w2_ref[...],
                preferred_element_type=jnp.float32)
    # Bias + sigmoid in f32 (EUP).
    o_ref[...] = jax.nn.sigmoid(y + b2_ref[...]).astype(o_ref.dtype)


def _round_up(n, m):
    return ((n + m - 1) // m) * m


def _block_diag(w, g):
    """(a, b) -> (g*a, g*b) with g copies of w on the diagonal (exact zeros off)."""
    if g == 1:
        return w
    a, b = w.shape
    eye = jnp.eye(g, dtype=w.dtype)
    return (eye[:, None, :, None] * w[None, :, None, :]).reshape(g * a, g * b)


def mlp_sonar_forward(x, w1, b1, w2, b2, *, block_b=8192):
    """x: (B, 60) f32, w1: (60, 40), b1: (1, 40), w2: (40, 2), b2: (1, 2)."""
    B, F = x.shape
    H = w1.shape[1]
    O = w2.shape[1]
    b1 = jnp.reshape(b1, (1, H)).astype(jnp.float32)
    b2 = jnp.reshape(b2, (1, O)).astype(jnp.float32)

    # Row-packing factor: g consecutive batch rows -> one packed row.
    # g=4 keeps packed K (240) and N (160) inside one 256x256 MXU tile.
    g = 4 if B % 4 == 0 else (2 if B % 2 == 0 else 1)
    Bp, Fp, Hp, Op = B // g, F * g, H * g, O * g

    xp = x.reshape(Bp, Fp)                            # free row-major reshape (no copy)
    w1p = _block_diag(w1, g).astype(jnp.bfloat16)     # tiny, one-time
    w2p = _block_diag(w2, g).astype(jnp.bfloat16)
    b1p = jnp.tile(b1, (1, g))                        # biases stay f32
    b2p = jnp.tile(b2, (1, g))

    # Packed-row tile: multiple of 8 sublanes, capped at block_b original rows
    # per step, and small enough that there are >= 2 grid steps when B allows
    # it (so v7x's two TensorCores both get work on the "parallel" axis).
    tbp = max(8, min(max(block_b // g, 8), _round_up(pl.cdiv(Bp, 2), 8)))
    grid = (pl.cdiv(Bp, tbp),)

    out_p = pl.pallas_call(
        mlp_sonar_kernel,
        out_shape=jax.ShapeDtypeStruct((Bp, Op), jnp.float32),
        grid=grid,
        in_specs=[
            pl.BlockSpec((tbp, Fp), lambda i: (i, 0)),   # x (f32): tiled over batch
            pl.BlockSpec((Fp, Hp), lambda i: (0, 0)),    # w1 (bf16): VMEM-resident
            pl.BlockSpec((1, Hp), lambda i: (0, 0)),     # b1 (f32): VMEM-resident
            pl.BlockSpec((Hp, Op), lambda i: (0, 0)),    # w2 (bf16): VMEM-resident
            pl.BlockSpec((1, Op), lambda i: (0, 0)),     # b2 (f32): VMEM-resident
        ],
        out_specs=pl.BlockSpec((tbp, Op), lambda i: (i, 0)),
        compiler_params=pltpu.CompilerParams(
            dimension_semantics=("parallel",),
            # ~13 MiB needed at the default tile; 48 MiB gives headroom and is
            # within physical VMEM on v5e/v6e (128 MiB) and v7x (64 MiB/TC).
            vmem_limit_bytes=48 * 1024 * 1024,
        ),
    )(xp, w1p, b1p, w2p, b2p)

    return out_p.reshape(B, O)                         # free row-major reshape back


def init_params(key, input_size=60, hidden_size=40, output_size=2):
    # Deterministic init mimicking PyTorch Linear default:
    # U(-1/sqrt(fan_in), 1/sqrt(fan_in)) for both weight and bias.
    k1, k2, k3, k4 = jax.random.split(key, 4)
    lim1 = 1.0 / jnp.sqrt(jnp.float32(input_size))
    lim2 = 1.0 / jnp.sqrt(jnp.float32(hidden_size))
    w1 = jax.random.uniform(k1, (input_size, hidden_size), jnp.float32, -lim1, lim1)
    b1 = jax.random.uniform(k2, (1, hidden_size), jnp.float32, -lim1, lim1)
    w2 = jax.random.uniform(k3, (hidden_size, output_size), jnp.float32, -lim2, lim2)
    b2 = jax.random.uniform(k4, (1, output_size), jnp.float32, -lim2, lim2)
    return w1, b1, w2, b2


if __name__ == "__main__":
    key = jax.random.PRNGKey(0)
    kx, kp = jax.random.split(key)

    # Small, module-consistent shapes; batch=200 with the default tile gives
    # two grid steps and exercises the ragged (masked) last block path.
    batch, input_size, hidden_size, output_size = 200, 60, 40, 2
    x = jax.random.normal(kx, (batch, input_size), jnp.float32)
    w1, b1, w2, b2 = init_params(kp, input_size, hidden_size, output_size)

    out = mlp_sonar_forward(x, w1, b1, w2, b2)
    out = jax.block_until_ready(out)

    # Reference in plain JAX, using the same bf16-rounded matmul operands so
    # the comparison tolerance stays tight (f32 accumulation on both sides).
    xr = x.astype(jnp.bfloat16).astype(jnp.float32)
    w1r = w1.astype(jnp.bfloat16).astype(jnp.float32)
    w2r = w2.astype(jnp.bfloat16).astype(jnp.float32)
    h_ref = jnp.maximum(xr @ w1r + b1, 0.0)
    y_ref = jax.nn.sigmoid(h_ref.astype(jnp.bfloat16).astype(jnp.float32) @ w2r + b2)

    assert out.shape == (batch, output_size)
    assert jnp.allclose(out, y_ref, atol=2e-3, rtol=2e-3), (
        float(jnp.max(jnp.abs(out - y_ref))))

    print("KERNEL_OK")
</pallas_src>

<mosaic_0001>
module attributes {stable_mosaic.version = 11 : i64} {
  func.func @mlp_sonar_kernel(%arg0: i32, %arg1: memref<32x240xf32, #tpu.memory_space<vmem>>, %arg2: memref<240x160xbf16, #tpu.memory_space<vmem>>, %arg3: memref<1x160xf32, #tpu.memory_space<vmem>>, %arg4: memref<160x8xbf16, #tpu.memory_space<vmem>>, %arg5: memref<1x8xf32, #tpu.memory_space<vmem>>, %arg6: memref<32x8xf32, #tpu.memory_space<vmem>>) attributes {dimension_semantics = [#tpu.dimension_semantics<parallel>], iteration_bounds = array<i64: 2>, scalar_prefetch = 0 : i64, scratch_operands = 0 : i64, tpu.core_type = #tpu.core_type<tc>, window_params = [{transform_indices = @transform_0, window_bounds = array<i64: 32, 240>}, {pipeline_mode = #tpu.pipeline_mode<synchronous>, transform_indices = @transform_1, window_bounds = array<i64: 240, 160>}, {pipeline_mode = #tpu.pipeline_mode<synchronous>, transform_indices = @transform_2, window_bounds = array<i64: 1, 160>}, {pipeline_mode = #tpu.pipeline_mode<synchronous>, transform_indices = @transform_3, window_bounds = array<i64: 160, 8>}, {pipeline_mode = #tpu.pipeline_mode<synchronous>, transform_indices = @transform_4, window_bounds = array<i64: 1, 8>}, {transform_indices = @transform_5, window_bounds = array<i64: 32, 8>}]} {
    %c0 = arith.constant 0 : index
    %c0_0 = arith.constant 0 : index
    %0 = vector.load %arg1[%c0, %c0_0] : memref<32x240xf32, #tpu.memory_space<vmem>>, vector<32x240xf32>
    %1 = arith.truncf %0 : vector<32x240xf32> to vector<32x240xbf16>
    %c0_1 = arith.constant 0 : index
    %c0_2 = arith.constant 0 : index
    %2 = vector.load %arg2[%c0_1, %c0_2] : memref<240x160xbf16, #tpu.memory_space<vmem>>, vector<240x160xbf16>
    %cst = arith.constant dense<0.000000e+00> : vector<32x160xf32>
    %3 = tpu.matmul %1, %2, %cst {dimension_numbers = #tpu.dot_dimension_numbers<[1], [0], [0], [1], [0, 0, 1, 1], [], []>} : vector<32x240xbf16>, vector<240x160xbf16>, vector<32x160xf32> -> vector<32x160xf32>
    %c0_3 = arith.constant 0 : index
    %c0_4 = arith.constant 0 : index
    %4 = vector.load %arg3[%c0_3, %c0_4] : memref<1x160xf32, #tpu.memory_space<vmem>>, vector<1x160xf32>
    %5 = vector.broadcast %4 : vector<1x160xf32> to vector<32x160xf32>
    %6 = arith.addf %3, %5 : vector<32x160xf32>
    %cst_5 = arith.constant 0.000000e+00 : f32
    %7 = vector.broadcast %cst_5 : f32 to vector<32x160xf32>
    %8 = arith.maximumf %6, %7 : vector<32x160xf32>
    %9 = arith.truncf %8 : vector<32x160xf32> to vector<32x160xbf16>
    %c0_6 = arith.constant 0 : index
    %c0_7 = arith.constant 0 : index
    %10 = vector.load %arg4[%c0_6, %c0_7] : memref<160x8xbf16, #tpu.memory_space<vmem>>, vector<160x8xbf16>
    %cst_8 = arith.constant dense<0.000000e+00> : vector<32x8xf32>
    %11 = tpu.matmul %9, %10, %cst_8 {dimension_numbers = #tpu.dot_dimension_numbers<[1], [0], [0], [1], [0, 0, 1, 1], [], []>} : vector<32x160xbf16>, vector<160x8xbf16>, vector<32x8xf32> -> vector<32x8xf32>
    %c0_9 = arith.constant 0 : index
    %c0_10 = arith.constant 0 : index
    %12 = vector.load %arg5[%c0_9, %c0_10] : memref<1x8xf32, #tpu.memory_space<vmem>>, vector<1x8xf32>
    %13 = vector.broadcast %12 : vector<1x8xf32> to vector<32x8xf32>
    %14 = arith.addf %11, %13 : vector<32x8xf32>
    %15 = arith.negf %14 : vector<32x8xf32>
    %16 = math.exp %15 : vector<32x8xf32>
    %cst_11 = arith.constant 1.000000e+00 : f32
    %17 = vector.broadcast %cst_11 : f32 to vector<32x8xf32>
    %18 = arith.addf %17, %16 : vector<32x8xf32>
    %19 = arith.divf %17, %18 : vector<32x8xf32>
    %c0_12 = arith.constant 0 : index
    %c0_13 = arith.constant 0 : index
    %20 = vector.load %arg6[%c0_12, %c0_13] : memref<32x8xf32, #tpu.memory_space<vmem>>, vector<32x8xf32>
    tpu.vector_store %arg6[%c0_12, %c0_13], %19 {strides = array<i32>} : memref<32x8xf32, #tpu.memory_space<vmem>>, vector<32x8xf32>,
    return
  }
  func.func @transform_0(%arg0: i32) -> (i32, i32) {
    %c0_i32 = arith.constant 0 : i32
    %c0_i32_0 = arith.constant 0 : i32
    return %arg0, %c0_i32 : i32, i32
  }
  func.func @transform_1(%arg0: i32) -> (i32, i32) {
    %c0_i32 = arith.constant 0 : i32
    %c0_i32_0 = arith.constant 0 : i32
    %c0_i32_1 = arith.constant 0 : i32
    return %c0_i32, %c0_i32_0 : i32, i32
  }
  func.func @transform_2(%arg0: i32) -> (i32, i32) {
    %c0_i32 = arith.constant 0 : i32
    %c0_i32_0 = arith.constant 0 : i32
    %c0_i32_1 = arith.constant 0 : i32
    return %c0_i32, %c0_i32_0 : i32, i32
  }
  func.func @transform_3(%arg0: i32) -> (i32, i32) {
    %c0_i32 = arith.constant 0 : i32
    %c0_i32_0 = arith.constant 0 : i32
    %c0_i32_1 = arith.constant 0 : i32
    return %c0_i32, %c0_i32_0 : i32, i32
  }
  func.func @transform_4(%arg0: i32) -> (i32, i32) {
    %c0_i32 = arith.constant 0 : i32
    %c0_i32_0 = arith.constant 0 : i32
    %c0_i32_1 = arith.constant 0 : i32
    return %c0_i32, %c0_i32_0 : i32, i32
  }
  func.func @transform_5(%arg0: i32) -> (i32, i32) {
    %c0_i32 = arith.constant 0 : i32
    %c0_i32_0 = arith.constant 0 : i32
    return %arg0, %c0_i32 : i32, i32
  }
}

</mosaic_0001>

<llo_original>
// kernel: tpu_custom_call.1
$region0: #{tpu_custom_call.1}
  #allocation0 [shape = 'u32[]', space=smem, size = 0x4, offset = 0x4, fixed_abs, tag = 'smem constant byte address 0x4 - core index']
  #allocation1 [shape = 'u32[144,128]{1,0:T(1,128)}', space=vmem, size = 0x12000, scoped, tag = 'internal scratch']
  %s0 = inlined_call_operand.vmem [shape: f32[50,240], index: 0, kind: input, shape index: {}]
  %s1 = inlined_call_operand.vmem [shape: bf16[240,160], index: 1, kind: input, shape index: {}]
  %s2 = inlined_call_operand.vmem [shape: f32[1,160], index: 2, kind: input, shape index: {}]
  %s3 = inlined_call_operand.vmem [shape: bf16[160,8], index: 3, kind: input, shape index: {}]
  %s4 = inlined_call_operand.vmem [shape: f32[1,8], index: 4, kind: input, shape index: {}]
  %s5 = inlined_call_operand.vmem [shape: f32[50,8], index: 5, kind: output, shape index: {}]
  %s6 = sld [smem:[#allocation0]]
  $region101: #{tpu_custom_call.1} parent=0
    _
  %s8 = ssub.s32 1, %s6
  %s9 = scalar_select 0, %s8, %s6
  $region1: #{tpu_custom_call.1} parent=0
    #allocation2 [shape = 'u8[32768]{0}', space=vmem, size = 0x8000, scoped, tag = 'output window, operand 0']
    loop: start=0, step=1, limit=4
    $region2: #{tpu_custom_call.1} parent=1 // loop_pre_header
      _
    $region3: #{tpu_custom_call.1} parent=1 // loop_header
      %s11 = sphi 0, %s15
      %p12 = scmp.ge.s32.totalorder %s11, 4
      %s21 = sphi 0, %s23
      %s24 = sphi 0, %s21
      %s25 = sphi 0, %s24
      %s41 = sphi 0, %s25
      %s45 = sphi 0, %s45
      %s47 = sphi 0, %s45
      %s48 = sphi 0, %s47
      %s62 = sphi 0, %s48
      %s66 = sphi 0, %s66
      %s68 = sphi 0, %s66
      %s69 = sphi 0, %s68
      %s83 = sphi 0, %s69
      %s87 = sphi 0, %s87
      %s89 = sphi 0, %s87
      %s90 = sphi 0, %s89
      %s104 = sphi 0, %s90
      %s108 = sphi 0, %s108
      %s110 = sphi 0, %s108
      %s111 = sphi 0, %s110
      %s125 = sphi 0, %s111
      %s131 = sphi 0, %s133
      %s134 = sphi 0, %s131
      %s135 = sphi 0, %s134
      %s151 = sphi 0, %s135
    $region4: #{tpu_custom_call.1} parent=1 // loop_header_branch
      %14 = sbr.rel (%p12) target = $region8
    $region5: #{tpu_custom_call.1} parent=1 // loop_body
      %s16 = ssub.s32 %s11, 1
      %s17 = ssub.s32 %s11, 2
      %s18 = sadd.s32 %s11, 1
      %s19 = ssub.s32 %s11, %s18
      %p20 = scmp.eq.s32.totalorder %s19, 0
      %s22 = sadd.s32 %s21, 1
      %s23 = scalar_select %p20, %s21, %s22
      %p26 = pneg %p20
      %p27 = scmp.eq.s32.totalorder %s11, 1
      %p28 = por %p26, %p27
      %p29 = scmp.ne.s32.totalorder %s21, %s24
      %p30 = scmp.eq.s32.totalorder %s11, 0
      %p31 = por %p29, %p30
      %p32 = scmp.ne.s32.totalorder %s21, %s24
      %p33 = scmp.eq.s32.totalorder %s16, 1
      %p34 = por %p32, %p33
      %p35 = scmp.ne.s32.totalorder %s24, %s25
      %p36 = scmp.eq.s32.totalorder %s16, 0
      %p37 = por %p35, %p36
      %p38 = scmp.ne.s32.totalorder %s24, %s25
      %p39 = scmp.eq.s32.totalorder %s17, 1
      %p40 = por %p38, %p39
      %p42 = scmp.ne.s32.totalorder %s25, %s41
      %p43 = scmp.eq.s32.totalorder %s17, 0
      %p44 = por %p42, %p43
      %s46 = sadd.s32 %s45, 1
      %p49 = scmp.eq.s32.totalorder %s11, 1
      %p50 = scmp.ne.s32.totalorder %s45, %s47
      %p51 = scmp.eq.s32.totalorder %s11, 0
      %p52 = por %p50, %p51
      %p53 = scmp.ne.s32.totalorder %s45, %s47
      %p54 = scmp.eq.s32.totalorder %s16, 1
      %p55 = por %p53, %p54
      %p56 = scmp.ne.s32.totalorder %s47, %s48
      %p57 = scmp.eq.s32.totalorder %s16, 0
      %p58 = por %p56, %p57
      %p59 = scmp.ne.s32.totalorder %s47, %s48
      %p60 = scmp.eq.s32.totalorder %s17, 1
      %p61 = por %p59, %p60
      %p63 = scmp.ne.s32.totalorder %s48, %s62
      %p64 = scmp.eq.s32.totalorder %s17, 0
      %p65 = por %p63, %p64
      %s67 = sadd.s32 %s66, 1
      %p70 = scmp.eq.s32.totalorder %s11, 1
      %p71 = scmp.ne.s32.totalorder %s66, %s68
      %p72 = scmp.eq.s32.totalorder %s11, 0
      %p73 = por %p71, %p72
      %p74 = scmp.ne.s32.totalorder %s66, %s68
      %p75 = scmp.eq.s32.totalorder %s16, 1
      %p76 = por %p74, %p75
      %p77 = scmp.ne.s32.totalorder %s68, %s69
      %p78 = scmp.eq.s32.totalorder %s16, 0
      %p79 = por %p77, %p78
      %p80 = scmp.ne.s32.totalorder %s68, %s69
      %p81 = scmp.eq.s32.totalorder %s17, 1
      %p82 = por %p80, %p81
      %p84 = scmp.ne.s32.totalorder %s69, %s83
      %p85 = scmp.eq.s32.totalorder %s17, 0
      %p86 = por %p84, %p85
      %s88 = sadd.s32 %s87, 1
      %p91 = scmp.eq.s32.totalorder %s11, 1
      %p92 = scmp.ne.s32.totalorder %s87, %s89
      %p93 = scmp.eq.s32.totalorder %s11, 0
      %p94 = por %p92, %p93
      %p95 = scmp.ne.s32.totalorder %s87, %s89
      %p96 = scmp.eq.s32.totalorder %s16, 1
      %p97 = por %p95, %p96
      %p98 = scmp.ne.s32.totalorder %s89, %s90
      %p99 = scmp.eq.s32.totalorder %s16, 0
      %p100 = por %p98, %p99
      %p101 = scmp.ne.s32.totalorder %s89, %s90
      %p102 = scmp.eq.s32.totalorder %s17, 1
      %p103 = por %p101, %p102
      %p105 = scmp.ne.s32.totalorder %s90, %s104
      %p106 = scmp.eq.s32.totalorder %s17, 0
      %p107 = por %p105, %p106
      %s109 = sadd.s32 %s108, 1
      %p112 = scmp.eq.s32.totalorder %s11, 1
      %p113 = scmp.ne.s32.totalorder %s108, %s110
      %p114 = scmp.eq.s32.totalorder %s11, 0
      %p115 = por %p113, %p114
      %p116 = scmp.ne.s32.totalorder %s108, %s110
      %p117 = scmp.eq.s32.totalorder %s16, 1
      %p118 = por %p116, %p117
      %p119 = scmp.ne.s32.totalorder %s110, %s111
      %p120 = scmp.eq.s32.totalorder %s16, 0
      %p121 = por %p119, %p120
      %p122 = scmp.ne.s32.totalorder %s110, %s111
      %p123 = scmp.eq.s32.totalorder %s17, 1
      %p124 = por %p122, %p123
      %p126 = scmp.ne.s32.totalorder %s111, %s125
      %p127 = scmp.eq.s32.totalorder %s17, 0
      %p128 = por %p126, %p127
      %s129 = ssub.s32 %s11, %s18
      %p130 = scmp.eq.s32.totalorder %s129, 0
      %s132 = sadd.s32 %s131, 1
      %s133 = scalar_select %p130, %s131, %s132
      %p136 = pneg %p130
      %p137 = scmp.eq.s32.totalorder %s11, 1
      %p138 = por %p136, %p137
      %p139 = scmp.ne.s32.totalorder %s131, %s134
      %p140 = scmp.eq.s32.totalorder %s11, 0
      %p141 = por %p139, %p140
      %p142 = scmp.ne.s32.totalorder %s131, %s134
      %p143 = scmp.eq.s32.totalorder %s16, 1
      %p144 = por %p142, %p143
      %p145 = scmp.ne.s32.totalorder %s134, %s135
      %p146 = scmp.eq.s32.totalorder %s16, 0
      %p147 = por %p145, %p146
      %p148 = scmp.ne.s32.totalorder %s134, %s135
      %p149 = scmp.eq.s32.totalorder %s17, 1
      %p150 = por %p148, %p149
      %p152 = scmp.ne.s32.totalorder %s135, %s151
      %p153 = scmp.eq.s32.totalorder %s17, 0
      %p154 = por %p152, %p153
      %p155 = scmp.le.s32.totalorder 1, %s11
      %p156 = scmp.lt.s32.totalorder %s11, 3
      %p157 = pnand %p155, %p156
      %p158 = pneg %p157
      // Predicated region
      $region9: #{tpu_custom_call.1} parent=5 // pred_check
        _
      $region10: #{tpu_custom_call.1} parent=5 // pred_check_branch
        %160 = sbr.rel (%p157) target = $region12
      $region11: #{tpu_custom_call.1} parent=5 // pred_region
        %s161 = ssub.s32 %s11, 1
        // Predicated region
        $region13: #{tpu_custom_call.1} parent=11 // pred_check
          %p162 = pneg %p58
        $region14: #{tpu_custom_call.1} parent=11 // pred_check_branch
          %164 = sbr.rel (%p162) target = $region16
        $region15: #{tpu_custom_call.1} parent=11 // pred_region
          _
        $region16: #{tpu_custom_call.1} parent=11 // pred_fallthru
          _
        // Predicated region
        $region17: #{tpu_custom_call.1} parent=11 // pred_check
          %p165 = pneg %p79
        $region18: #{tpu_custom_call.1} parent=11 // pred_check_branch
          %167 = sbr.rel (%p165) target = $region20
        $region19: #{tpu_custom_call.1} parent=11 // pred_region
          _
        $region20: #{tpu_custom_call.1} parent=11 // pred_fallthru
          _
        // Predicated region
        $region21: #{tpu_custom_call.1} parent=11 // pred_check
          %p168 = pneg %p100
        $region22: #{tpu_custom_call.1} parent=11 // pred_check_branch
          %170 = sbr.rel (%p168) target = $region24
        $region23: #{tpu_custom_call.1} parent=11 // pred_region
          _
        $region24: #{tpu_custom_call.1} parent=11 // pred_fallthru
          _
        // Predicated region
        $region25: #{tpu_custom_call.1} parent=11 // pred_check
          %p171 = pneg %p121
        $region26: #{tpu_custom_call.1} parent=11 // pred_check_branch
          %173 = sbr.rel (%p171) target = $region28
        $region27: #{tpu_custom_call.1} parent=11 // pred_region
          _
        $region28: #{tpu_custom_call.1} parent=11 // pred_fallthru
          _
      $region12: #{tpu_custom_call.1} parent=5 // pred_fallthru
        _
      %p174 = scmp.lt.s32.totalorder %s11, 2
      // Predicated region
      $region29: #{tpu_custom_call.1} parent=5 // pred_check
        %p175 = pneg %p174
      $region30: #{tpu_custom_call.1} parent=5 // pred_check_branch
        %177 = sbr.rel (%p175) target = $region32
      $region31: #{tpu_custom_call.1} parent=5 // pred_region
        // Predicated region
        $region33: #{tpu_custom_call.1} parent=31 // pred_check
          %p178 = pneg %p31
        $region34: #{tpu_custom_call.1} parent=31 // pred_check_branch
          %180 = sbr.rel (%p178) target = $region36
        $region35: #{tpu_custom_call.1} parent=31 // pred_region
          %s181 = smul.u32 4, %s11
          %s182 = ssub.s32 7, %s181
          %p183 = scmp.lt.s32.totalorder %s182, 4
          %s184 = scalar_select %p183, %s182, 4
          %s185 = smul.u32 128, %s184
          %s186 = smul.u32 %s185, 2
          %p187 = scmp.lt.s32.totalorder %s181, 6
          %s188 = scalar_select %p187, %s181, 6
          %s189 = smul.addr %s188, 2
          %s190 = smul.addr %s189, 8
          %s191 = scalar_lea.vmem %s0, %s190
          %s192 = smul.u32 4, %s11
          %s193 = ssub.s32 7, %s192
          %p194 = scmp.lt.s32.totalorder %s193, 4
          %s195 = scalar_select %p194, %s193, 4
          %s196 = smul.u32 128, %s195
          %s197 = smul.u32 %s196, 2
        $region36: #{tpu_custom_call.1} parent=31 // pred_fallthru
          _
      $region32: #{tpu_custom_call.1} parent=5 // pred_fallthru
        _
      %p198 = scmp.le.s32.totalorder 1, %s11
      %p199 = scmp.lt.s32.totalorder %s11, 3
      %p200 = pnand %p198, %p199
      %p201 = pneg %p200
      // Predicated region
      $region37: #{tpu_custom_call.1} parent=5 // pred_check
        _
      $region38: #{tpu_custom_call.1} parent=5 // pred_check_branch
        %203 = sbr.rel (%p200) target = $region40
      $region39: #{tpu_custom_call.1} parent=5 // pred_region
        %s204 = ssub.s32 %s11, 1
        %s205 = smul.u32 4, %s16
        %s206 = ssub.s32 7, %s205
        %p207 = scmp.lt.s32.totalorder %s206, 4
        %s208 = scalar_select %p207, %s206, 4
        %s209 = smul.u32 128, %s208
        %s210 = smul.u32 %s209, 2
        %p211 = scmp.lt.s32.totalorder %s205, 6
        %s212 = scalar_select %p211, %s205, 6
        %s213 = smul.addr %s212, 2
        %s214 = smul.addr %s213, 8
        %s215 = scalar_lea.vmem %s0, %s214
        %p216 = pneg %p37
        %p217 = pneg %p34
        %p218 = pneg %p58
        %p219 = pneg %p55
        %p220 = pneg %p79
        %p221 = pneg %p76
        %p222 = pneg %p100
        %p223 = pneg %p97
        %p224 = pneg %p121
        %p225 = pneg %p118
        %p226 = pneg %p147
        %p227 = pneg %p144
        %s228 = sand.u32 %s134, 1
        %s229 = sand.u32 %s134, 1
        %s230 = smul.addr %s229, 32
        %s231 = scalar_lea.vmem [#allocation2], %s230
        %s232 = smul.u32 4, %s16
        %s233 = ssub.s32 7, %s232
        %p234 = scmp.lt.s32.totalorder %s233, 4
        %s235 = scalar_select %p234, %s233, 4
        %s236 = smul.u32 128, %s235
        %s237 = smul.u32 %s236, 2
        %p238 = scmp.lt.s32.totalorder %s232, 6
        %s239 = scalar_select %p238, %s232, 6
        %s240 = smul.addr %s239, 2
        %s241 = smul.addr %s240, 8
        %s242 = scalar_lea.vmem %s0, %s241
        %s243 = smul.u32 4, %s16
        %s244 = ssub.s32 7, %s243
        %p245 = scmp.lt.s32.totalorder %s244, 4
        %s246 = scalar_select %p245, %s244, 4
        %s247 = smul.u32 128, %s246
        %s248 = smul.u32 %s247, 2
        %s249 = smul.u32 4, %s16
        %s250 = ssub.s32 7, %s249
        %p251 = scmp.lt.s32.totalorder %s250, 4
        %s252 = scalar_select %p251, %s250, 4
        %s253 = smul.u32 128, %s252
        %v255 = vld [vmem:[%s242] sm:$0xff]
        %v256 = vld [vmem:[%s242 + $0x8] sm:$0xff]
        %v257 = vld [vmem:[%s242 + $0x10] sm:$0xff]
        %v258 = vld [vmem:[%s242 + $0x18] sm:$0xff]
        %v259 = vld [vmem:[%s242 + $0x20] sm:$0xff]
        %v260 = vld [vmem:[%s242 + $0x28] sm:$0xff]
        %v261 = vld [vmem:[%s242 + $0x30] sm:$0xff]
        %v262 = vld [vmem:[%s242 + $0x38] sm:$0xff]
        %v263 = vpack.c.bf16 %v257, %v255
        %v264 = vpack.c.bf16 %v258, %v256
        %v265 = vpack.c.bf16 %v261, %v259
        %v266 = vpack.c.bf16 %v262, %v260
        %v267 = vld [vmem:[%s1] sm:$0xff]
        %v268 = vld [vmem:[%s1 + $0x8] sm:$0xff]
        %v269 = vld [vmem:[%s1 + $0x10] sm:$0xff]
        %v270 = vld [vmem:[%s1 + $0x18] sm:$0xff]
        %v271 = vld [vmem:[%s1 + $0x20] sm:$0xff]
        %v272 = vld [vmem:[%s1 + $0x28] sm:$0xff]
        %v273 = vld [vmem:[%s1 + $0x30] sm:$0xff]
        %v274 = vld [vmem:[%s1 + $0x38] sm:$0xff]
        %v275 = vld [vmem:[%s1 + $0x40] sm:$0xff]
        %v276 = vld [vmem:[%s1 + $0x48] sm:$0xff]
        %v277 = vld [vmem:[%s1 + $0x50] sm:$0xff]
        %v278 = vld [vmem:[%s1 + $0x58] sm:$0xff]
        %v279 = vld [vmem:[%s1 + $0x60] sm:$0xff]
        %v280 = vld [vmem:[%s1 + $0x68] sm:$0xff]
        %v281 = vld [vmem:[%s1 + $0x70] sm:$0xff]
        %v282 = vld [vmem:[%s1 + $0x78] sm:$0xff]
        %v283 = vld [vmem:[%s1 + $0x80] sm:$0xff]
        %v284 = vld [vmem:[%s1 + $0x88] sm:$0xff]
        %v285 = vld [vmem:[%s1 + $0x90] sm:$0xff]
        %v286 = vld [vmem:[%s1 + $0x98] sm:$0xff]
        %v287 = vld [vmem:[%s1 + $0xa0] sm:$0xff]
        %v288 = vld [vmem:[%s1 + $0xa8] sm:$0xff]
        %v289 = vld [vmem:[%s1 + $0xb0] sm:$0xff]
        %v290 = vld [vmem:[%s1 + $0xb8] sm:$0xff]
        %v291 = vld [vmem:[%s1 + $0xc0] sm:$0xff]
        %v292 = vld [vmem:[%s1 + $0xc8] sm:$0xff]
        %v293 = vld [vmem:[%s1 + $0xd0] sm:$0xff]
        %v294 = vld [vmem:[%s1 + $0xd8] sm:$0xff]
        %v295 = vld [vmem:[%s1 + $0xe0] sm:$0xff]
        %v296 = vld [vmem:[%s1 + $0xe8] sm:$0xff]
        %v297 = vld [vmem:[%s2] sm:$0x3]
        %v299 = vlaneseq
        %v300 = vshrl.u32 %v299, 7
        %v301 = vsub.s32 0, %v300
        %v302 = vrot.slane %v297, %v301
        %v303 = vlaneseq
        %v304 = vshrl.u32 %v303, 7
        %v305 = vsub.s32 1, %v304
        %v306 = vrot.slane %v297, %v305
        %v339 = vunpack.c.l.b16 %v267
        %v340 = vunpack.c.h.b16 %v267
        %v341 = vunpack.c.l.b16 %v268
        %v342 = vunpack.c.h.b16 %v268
        %v343 = vunpack.c.l.b16 %v269
        %v344 = vunpack.c.h.b16 %v269
        %v345 = vunpack.c.l.b16 %v270
        %v346 = vunpack.c.h.b16 %v270
        %v347 = vunpack.c.l.b16 %v271
        %v348 = vunpack.c.h.b16 %v271
        %v349 = vunpack.c.l.b16 %v272
        %v350 = vunpack.c.h.b16 %v272
        %v351 = vunpack.c.l.b16 %v273
        %v352 = vunpack.c.h.b16 %v273
        %v353 = vunpack.c.l.b16 %v274
        %v354 = vunpack.c.h.b16 %v274
        %v355 = vunpack.c.l.b16 %v275
        %v356 = vunpack.c.h.b16 %v275
        %v357 = vunpack.c.l.b16 %v276
        %v358 = vunpack.c.h.b16 %v276
        %v359 = vunpack.c.l.b16 %v277
        %v360 = vunpack.c.h.b16 %v277
        %v361 = vunpack.c.l.b16 %v278
        %v362 = vunpack.c.h.b16 %v278
        %v363 = vunpack.c.l.b16 %v279
        %v364 = vunpack.c.h.b16 %v279
        %v365 = vunpack.c.l.b16 %v280
        %v366 = vunpack.c.h.b16 %v280
        %v367 = vunpack.c.l.b16 %v281
        %v368 = vunpack.c.h.b16 %v281
        %v369 = vunpack.c.l.b16 %v282
        %v370 = vunpack.c.h.b16 %v282
        %v371 = vunpack.c.l.b16 %v283
        %v372 = vunpack.c.h.b16 %v283
        %v373 = vunpack.c.l.b16 %v284
        %v374 = vunpack.c.h.b16 %v284
        %v375 = vunpack.c.l.b16 %v285
        %v376 = vunpack.c.h.b16 %v285
        %v377 = vunpack.c.l.b16 %v286
        %v378 = vunpack.c.h.b16 %v286
        %v379 = vunpack.c.l.b16 %v287
        %v380 = vunpack.c.h.b16 %v287
        %v381 = vunpack.c.l.b16 %v288
        %v382 = vunpack.c.h.b16 %v288
        %v383 = vunpack.c.l.b16 %v289
        %v384 = vunpack.c.h.b16 %v289
        %v385 = vunpack.c.l.b16 %v290
        %v386 = vunpack.c.h.b16 %v290
        %v387 = vunpack.c.l.b16 %v291
        %v388 = vunpack.c.h.b16 %v291
        %v389 = vunpack.c.l.b16 %v292
        %v390 = vunpack.c.h.b16 %v292
        %v391 = vunpack.c.l.b16 %v293
        %v392 = vunpack.c.h.b16 %v293
        %v393 = vunpack.c.l.b16 %v294
        %v394 = vunpack.c.h.b16 %v294
        %v395 = vunpack.c.l.b16 %v295
        %v396 = vunpack.c.h.b16 %v295
        %v397 = vunpack.c.l.b16 %v296
        %v398 = vunpack.c.h.b16 %v296
        %v399 = vpack.c.b16 %v341, %v339
        %v400 = vpack.c.b16 %v342, %v340
        %v401 = vpack.c.b16 %v345, %v343
        %v402 = vpack.c.b16 %v346, %v344
        %v403 = vpack.c.b16 %v349, %v347
        %v404 = vpack.c.b16 %v350, %v348
        %v405 = vpack.c.b16 %v353, %v351
        %v406 = vpack.c.b16 %v354, %v352
        %v407 = vpack.c.b16 %v357, %v355
        %v408 = vpack.c.b16 %v358, %v356
        %v409 = vpack.c.b16 %v361, %v359
        %v410 = vpack.c.b16 %v362, %v360
        %v411 = vpack.c.b16 %v365, %v363
        %v412 = vpack.c.b16 %v366, %v364
        %v413 = vpack.c.b16 %v369, %v367
        %v414 = vpack.c.b16 %v370, %v368
        %v415 = vpack.c.b16 %v373, %v371
        %v416 = vpack.c.b16 %v374, %v372
        %v417 = vpack.c.b16 %v377, %v375
        %v418 = vpack.c.b16 %v378, %v376
        %v419 = vpack.c.b16 %v381, %v379
        %v420 = vpack.c.b16 %v382, %v380
        %v421 = vpack.c.b16 %v385, %v383
        %v422 = vpack.c.b16 %v386, %v384
        %v423 = vpack.c.b16 %v389, %v387
        %v424 = vpack.c.b16 %v390, %v388
        %v425 = vpack.c.b16 %v393, %v391
        %v426 = vpack.c.b16 %v394, %v392
        %v427 = vpack.c.b16 %v397, %v395
        %v428 = vpack.c.b16 %v398, %v396
        %vm459 = vcmask 916480
        %v461 = vsel %vm459, %v264, 0
        %v464 = vsel %vm459, %v266, 0
        %466 = vmatprep.subr.bf16.mxu0 %v400
        %467 = vmatpush1.bf16.msra.mxu0 %v399
        %468 = vmatprep.subr.bf16.mxu0 %v402
        %469 = vmatpush1.bf16.msra.mxu0 %v401
        %470 = vmatprep.subr.bf16.mxu0 %v404
        %471 = vmatpush1.bf16.msra.mxu0 %v403
        %472 = vmatprep.subr.bf16.mxu0 %v406
        %473 = vmatpush1.bf16.msra.mxu0 %v405
        %474 = vmatprep.subr.bf16.mxu0 %v408
        %475 = vmatpush1.bf16.msra.mxu0 %v407
        %476 = vmatprep.subr.bf16.mxu0 %v410
        %477 = vmatpush1.bf16.msra.mxu0 %v409
        %478 = vmatprep.subr.bf16.mxu0 %v412
        %479 = vmatpush1.bf16.msra.mxu0 %v411
        %480 = vmatprep.subr.bf16.mxu0 %v414
        %481 = vmatpush1.bf16.msra.mxu0 %v413
        %482 = vmatprep.subr.bf16.mxu0 %v416
        %483 = vmatpush1.bf16.msra.mxu0 %v415
        %484 = vmatprep.subr.bf16.mxu0 %v418
        %485 = vmatpush1.bf16.msra.mxu0 %v417
        %486 = vmatprep.subr.bf16.mxu0 %v420
        %487 = vmatpush1.bf16.msra.mxu0 %v419
        %488 = vmatprep.subr.bf16.mxu0 %v422
        %489 = vmatpush1.bf16.msra.mxu0 %v421
        %490 = vmatprep.subr.bf16.mxu0 %v424
        %491 = vmatpush1.bf16.msra.mxu0 %v423
        %492 = vmatprep.subr.bf16.mxu0 %v426
        %493 = vmatpush1.bf16.msra.mxu0 %v425
        %494 = vmatprep.subr.bf16.mxu0 %v428
        %495 = vmatpush1.bf16.msra.mxu0 %v427
        %496 = vmatprep.subr.bf16.mxu0 0
        %497 = vmatpush1.bf16.msra.mxu0 0
        %498 = vmatprep.mubr.bf16.mxu0 %v461
        %499 = vmatmul.mubr.bf16.gmra.mrb[0].mxu0 %v263
        %v500 = vpop.f32.mrb[0].mxu0
        %v501 = vadd.f32 %v302, %v500
        %v502 = vpop.f32.mrb[0].mxu0
        %v503 = vadd.f32 %v306, %v502
        %v504 = vpop.f32.mrb[0].mxu0
        %v505 = vadd.f32 %v302, %v504
        %v506 = vpop.f32.mrb[0].mxu0
        %v507 = vadd.f32 %v306, %v506
        %508 = vmatprep.mubr.bf16.mxu0 %v464
        %509 = vmatmul.mubr.bf16.gmra.mrb[0].mxu0 %v265
        %v510 = vpop.f32.mrb[0].mxu0
        %v511 = vadd.f32 %v302, %v510
        %v512 = vpop.f32.mrb[0].mxu0
        %v513 = vadd.f32 %v306, %v512
        %v514 = vpop.f32.mrb[0].mxu0
        %v515 = vadd.f32 %v302, %v514
        %v516 = vpop.f32.mrb[0].mxu0
        %v517 = vadd.f32 %v306, %v516
        %518 = vdwg.mxu0
        %v519 = vmax.f32 %v501, 0.0
        %v520 = vmax.f32 %v503, 0.0
        %v521 = vmax.f32 %v505, 0.0
        %v522 = vmax.f32 %v507, 0.0
        %v523 = vmax.f32 %v511, 0.0
        %v524 = vmax.f32 %v513, 0.0
        %v525 = vmax.f32 %v515, 0.0
        %v526 = vmax.f32 %v517, 0.0
        %v527 = vpack.c.bf16 %v521, %v519
        %v528 = vpack.c.bf16 %v522, %v520
        %v529 = vpack.c.bf16 %v525, %v523
        %v530 = vpack.c.bf16 %v526, %v524
        %v531 = vld [vmem:[%s3] sm:$0xf]
        %v532 = vld [vmem:[%s3 + $0x4] sm:$0xf]
        %v533 = vld [vmem:[%s3 + $0x8] sm:$0xf]
        %v534 = vld [vmem:[%s3 + $0xc] sm:$0xf]
        %v535 = vld [vmem:[%s3 + $0x10] sm:$0xf]
        %v536 = vld [vmem:[%s3 + $0x14] sm:$0xf]
        %v537 = vld [vmem:[%s3 + $0x18] sm:$0xf]
        %v538 = vld [vmem:[%s3 + $0x1c] sm:$0xf]
        %v539 = vld [vmem:[%s3 + $0x20] sm:$0xf]
        %v540 = vld [vmem:[%s3 + $0x24] sm:$0xf]
        %v541 = vld [vmem:[%s3 + $0x28] sm:$0xf]
        %v542 = vld [vmem:[%s3 + $0x2c] sm:$0xf]
        %v543 = vld [vmem:[%s3 + $0x30] sm:$0xf]
        %v544 = vld [vmem:[%s3 + $0x34] sm:$0xf]
        %v545 = vld [vmem:[%s3 + $0x38] sm:$0xf]
        %v546 = vld [vmem:[%s3 + $0x3c] sm:$0xf]
        %v547 = vld [vmem:[%s3 + $0x40] sm:$0xf]
        %v548 = vld [vmem:[%s3 + $0x44] sm:$0xf]
        %v549 = vld [vmem:[%s3 + $0x48] sm:$0xf]
        %v550 = vld [vmem:[%s3 + $0x4c] sm:$0xf]
        %v551 = vld [vmem:[%s4] sm:$0x1]
        %v553 = vlaneseq
        %v554 = vshrl.u32 %v553, 7
        %v555 = vsub.s32 0, %v554
        %v556 = vrot.slane %v551, %v555
        %v578 = vunpack.c.l.b16 %v531
        %v579 = vunpack.c.l.b16 %v532
        %v580 = vunpack.c.l.b16 %v533
        %v581 = vunpack.c.l.b16 %v534
        %v582 = vunpack.c.l.b16 %v535
        %v583 = vunpack.c.l.b16 %v536
        %v584 = vunpack.c.l.b16 %v537
        %v585 = vunpack.c.l.b16 %v538
        %v586 = vunpack.c.l.b16 %v539
        %v587 = vunpack.c.l.b16 %v540
        %v588 = vunpack.c.l.b16 %v541
        %v589 = vunpack.c.l.b16 %v542
        %v590 = vunpack.c.l.b16 %v543
        %v591 = vunpack.c.l.b16 %v544
        %v592 = vunpack.c.l.b16 %v545
        %v593 = vunpack.c.l.b16 %v546
        %v594 = vunpack.c.l.b16 %v547
        %v595 = vunpack.c.l.b16 %v548
        %v596 = vunpack.c.l.b16 %v549
        %v597 = vunpack.c.l.b16 %v550
        %v598 = vpack.c.b16 %v579, %v578
        %v599 = vpack.c.b16 %v581, %v580
        %v600 = vpack.c.b16 %v583, %v582
        %v601 = vpack.c.b16 %v585, %v584
        %v602 = vpack.c.b16 %v587, %v586
        %v603 = vpack.c.b16 %v589, %v588
        %v604 = vpack.c.b16 %v591, %v590
        %v605 = vpack.c.b16 %v593, %v592
        %v606 = vpack.c.b16 %v595, %v594
        %v607 = vpack.c.b16 %v597, %v596
        %vm618 = vcmask 261120
        %v620 = vsel %vm618, %v528, 0
        %v623 = vsel %vm618, %v530, 0
        %625 = vmatprep.subr.bf16.mxu0 0
        %626 = vmatpush1.bf16.msra.mxu0 %v598
        %627 = vmatprep.subr.bf16.mxu0 0
        %628 = vmatpush1.bf16.msra.mxu0 %v599
        %629 = vmatprep.subr.bf16.mxu0 0
        %630 = vmatpush1.bf16.msra.mxu0 %v600
        %631 = vmatprep.subr.bf16.mxu0 0
        %632 = vmatpush1.bf16.msra.mxu0 %v601
        %633 = vmatprep.subr.bf16.mxu0 0
        %634 = vmatpush1.bf16.msra.mxu0 %v602
        %635 = vmatprep.subr.bf16.mxu0 0
        %636 = vmatpush1.bf16.msra.mxu0 %v603
        %637 = vmatprep.subr.bf16.mxu0 0
        %638 = vmatpush1.bf16.msra.mxu0 %v604
        %639 = vmatprep.subr.bf16.mxu0 0
        %640 = vmatpush1.bf16.msra.mxu0 %v605
        %641 = vmatprep.subr.bf16.mxu0 0
        %642 = vmatpush1.bf16.msra.mxu0 %v606
        %643 = vmatprep.subr.bf16.mxu0 0
        %644 = vmatpush1.bf16.msra.mxu0 %v607
        %645 = vmatprep.subr.bf16.mxu0 0
        %646 = vmatpush1.bf16.msra.mxu0 0
        %647 = vmatprep.subr.bf16.mxu0 0
        %648 = vmatpush1.bf16.msra.mxu0 0
        %649 = vmatprep.subr.bf16.mxu0 0
        %650 = vmatpush1.bf16.msra.mxu0 0
        %651 = vmatprep.subr.bf16.mxu0 0
        %652 = vmatpush1.bf16.msra.mxu0 0
        %653 = vmatprep.subr.bf16.mxu0 0
        %654 = vmatpush1.bf16.msra.mxu0 0
        %655 = vmatprep.subr.bf16.mxu0 0
        %656 = vmatpush1.bf16.msra.mxu0 0
        %657 = vmatprep.mubr.bf16.mxu0 %v620
        %658 = vmatmul.mubr.bf16.gmra.mrb[0].mxu0 %v527
        %v659 = vpop.f32.mrb[0].mxu0
        %v660 = vadd.f32 %v556, %v659
        %v661 = vpop.f32.mrb[0].mxu0
        %v662 = vpop.f32.mrb[0].mxu0
        %v663 = vadd.f32 %v556, %v662
        %v664 = vpop.f32.mrb[0].mxu0
        %665 = vmatprep.mubr.bf16.mxu0 %v623
        %666 = vmatmul.mubr.bf16.gmra.mrb[0].mxu0 %v529
        %v667 = vpop.f32.mrb[0].mxu0
        %v668 = vadd.f32 %v556, %v667
        %v669 = vpop.f32.mrb[0].mxu0
        %v670 = vpop.f32.mrb[0].mxu0
        %v671 = vadd.f32 %v556, %v670
        %v672 = vpop.f32.mrb[0].mxu0
        %673 = vdwg.mxu0
        %v674 = vxor.u32 %v660, 2147483648
        %v675 = vxor.u32 %v663, 2147483648
        %v676 = vxor.u32 %v668, 2147483648
        %v677 = vxor.u32 %v671, 2147483648
        %v678 = vmul.f32 %v674, 1.442695
        %v679 = vpow.pop %v678
        %v680 = vmul.f32 %v675, 1.442695
        %v681 = vpow.pop %v680
        %v682 = vmul.f32 %v676, 1.442695
        %v683 = vpow.pop %v682
        %v684 = vmul.f32 %v677, 1.442695
        %v685 = vpow.pop %v684
        %v686 = vadd.f32 %v679, 1.0
        %v687 = vadd.f32 %v681, 1.0
        %v688 = vadd.f32 %v683, 1.0
        %v689 = vadd.f32 %v685, 1.0
        %v690 = vrcp.pop %v686
        %v691 = vmul.f32 1.0, %v690
        %v692 = vrcp.pop %v687
        %v693 = vmul.f32 1.0, %v692
        %v694 = vrcp.pop %v688
        %v695 = vmul.f32 1.0, %v694
        %v696 = vrcp.pop %v689
        %v697 = vmul.f32 1.0, %v696
        %vm698 = vcmask 64512
        %699 = vst.msk [vmem:[%s231] sm:$0xff] %vm698, %v691
        %700 = vst.msk [vmem:[%s231 + $0x8] sm:$0xff] %vm698, %v693
        %701 = vst.msk [vmem:[%s231 + $0x10] sm:$0xff] %vm698, %v695
        %702 = vst.msk [vmem:[%s231 + $0x18] sm:$0xff] %vm698, %v697
        %s703 = sand.u32 %s134, 1
        %s704 = sand.u32 %s134, 1
        %s705 = smul.addr %s704, 32
        %s706 = scalar_lea.vmem [#allocation2], %s705
        // Predicated region
        $region41: #{tpu_custom_call.1} parent=39 // pred_check
          %p707 = pneg %p144
        $region42: #{tpu_custom_call.1} parent=39 // pred_check_branch
          %709 = sbr.rel (%p707) target = $region44
        $region43: #{tpu_custom_call.1} parent=39 // pred_region
          %s710 = smul.u32 4, %s16
          %s711 = ssub.s32 7, %s710
          %p712 = scmp.lt.s32.totalorder %s711, 4
          %s713 = scalar_select %p712, %s711, 4
          %s714 = smul.u32 128, %s713
          %p715 = scmp.ne.s32.totalorder 0, %s714
          %s716 = smul.addr %s710, 8
          %s717 = scalar_lea.vmem %s5, %s716
          // Predicated region
          $region45: #{tpu_custom_call.1} parent=43 // pred_check
            %p718 = pneg %p715
          $region46: #{tpu_custom_call.1} parent=43 // pred_check_branch
            %720 = sbr.rel (%p718) target = $region48
          $region47: #{tpu_custom_call.1} parent=43 // pred_region
            // Predicated region
            $region49: #{tpu_custom_call.1} parent=47 // pred_check
              _
            $region50: #{tpu_custom_call.1} parent=47 // pred_check_branch
              %722 = sbr.rel (0) target = $region52
            $region51: #{tpu_custom_call.1} parent=47 // pred_region
              // Predicated region
              $region71: #{tpu_custom_call.1} parent=51 // pred_check
                _
              $region72: #{tpu_custom_call.1} parent=51 // pred_check_branch
                %777 = sbr.rel (0) target = $region74
              $region73: #{tpu_custom_call.1} parent=51 // pred_region
                %s778 = sshrl.u32 %s713, 2
                // While loop
                $region75: #{tpu_custom_call.1} parent=73 // loop_pre_header
                  _
                $region76: #{tpu_custom_call.1} parent=73 // loop_header
                  %s780 = sphi 0, %s782
                  %p781 = scmp.ge.s32.totalorder %s780, %s778
                  %s785 = sphi 0, %s798
                  %s786 = sphi %s706, %s801
                  %s787 = sphi %s717, %s802
                $region77: #{tpu_custom_call.1} parent=73 // loop_header_branch
                  %784 = sbr.rel (%p781) target = $region81
                $region78: #{tpu_custom_call.1} parent=73 // loop_body
                  %v788 = vld [vmem:[%s786] sm:$0xff]
                  %789 = vst [vmem:[%s787] sm:$0xff] %v788
                  %v790 = vld [vmem:[%s786 + $0x8] sm:$0xff]
                  %791 = vst [vmem:[%s787 + $0x8] sm:$0xff] %v790
                  %v792 = vld [vmem:[%s786 + $0x10] sm:$0xff]
                  %793 = vst [vmem:[%s787 + $0x10] sm:$0xff] %v792
                  %v794 = vld [vmem:[%s786 + $0x18] sm:$0xff]
                  %795 = vst [vmem:[%s787 + $0x18] sm:$0xff] %v794
                  %s796 = sadd.s32 1, %s785
                  %p797 = scmp.ge.s32.totalorder %s796, %s778
                  %s798 = scalar_select %p797, 0, %s796
                  %s799 = smul.u32 %s798, 32
                  %s800 = smul.u32 %s798, 32
                  %s801 = scalar_lea.vmem %s706, %s799 [#allocation2]
                  %s802 = scalar_lea.vmem %s717, %s800
                $region79: #{tpu_custom_call.1} parent=73 // loop_footer
                  %s782 = sadd.s32 %s780, 1
                $region80: #{tpu_custom_call.1} parent=73 // loop_footer_branch
                  %779 = sbr.rel target = $region76
                $region81: #{tpu_custom_call.1} parent=73 // loop_exit
                  _
                %s803 = sshrl.u32 %s713, 2
                %s804 = sand.u32 %s713, 3
                %s805 = smul.u32 %s803, 4
                %s806 = smul.u32 8, %s805
                %s807 = scalar_lea.vmem %s706, %s806 [#allocation2]
                %s808 = smul.u32 8, %s805
                %s809 = scalar_lea.vmem %s717, %s808
                // While loop
                $region82: #{tpu_custom_call.1} parent=73 // loop_pre_header
                  _
                $region83: #{tpu_custom_call.1} parent=73 // loop_header
                  %s811 = sphi 0, %s813
                  %p812 = scmp.ge.s32.totalorder %s811, %s804
                  %s816 = sphi 0, %s823
                  %s817 = sphi %s807, %s826
                  %s818 = sphi %s809, %s827
                $region84: #{tpu_custom_call.1} parent=73 // loop_header_branch
                  %815 = sbr.rel (%p812) target = $region88
                $region85: #{tpu_custom_call.1} parent=73 // loop_body
                  %v819 = vld [vmem:[%s817] sm:$0xff]
                  %820 = vst [vmem:[%s818] sm:$0xff] %v819
                  %s821 = sadd.s32 1, %s816
                  %p822 = scmp.ge.s32.totalorder %s821, %s804
                  %s823 = scalar_select %p822, 0, %s821
                  %s824 = smul.u32 %s823, 8
                  %s825 = smul.u32 %s823, 8
                  %s826 = scalar_lea.vmem %s807, %s824 [#allocation2]
                  %s827 = scalar_lea.vmem %s809, %s825
                $region86: #{tpu_custom_call.1} parent=73 // loop_footer
                  %s813 = sadd.s32 %s811, 1
                $region87: #{tpu_custom_call.1} parent=73 // loop_footer_branch
                  %810 = sbr.rel target = $region83
                $region88: #{tpu_custom_call.1} parent=73 // loop_exit
                  _
              $region74: #{tpu_custom_call.1} parent=51 // pred_fallthru
                _
              // Predicated region
              $region89: #{tpu_custom_call.1} parent=51 // pred_check
                _
              $region90: #{tpu_custom_call.1} parent=51 // pred_check_branch
                %829 = sbr.rel target = $region92
              $region91: #{tpu_custom_call.1} parent=51 // pred_region
                _
              $region92: #{tpu_custom_call.1} parent=51 // pred_fallthru
                _
            $region52: #{tpu_custom_call.1} parent=47 // pred_fallthru
              _
            // Predicated region
            $region53: #{tpu_custom_call.1} parent=47 // pred_check
              _
            $region54: #{tpu_custom_call.1} parent=47 // pred_check_branch
              %724 = sbr.rel target = $region56
            $region55: #{tpu_custom_call.1} parent=47 // pred_region
              %s726 = sshrl.u32 %s713, 2
              // While loop
              $region57: #{tpu_custom_call.1} parent=55 // loop_pre_header
                _
              $region58: #{tpu_custom_call.1} parent=55 // loop_header
                %s728 = sphi 0, %s730
                %p729 = scmp.ge.s32.totalorder %s728, %s726
                %s733 = sphi 0, %s746
                %s734 = sphi %s706, %s749
                %s735 = sphi %s717, %s750
              $region59: #{tpu_custom_call.1} parent=55 // loop_header_branch
                %732 = sbr.rel (%p729) target = $region63
              $region60: #{tpu_custom_call.1} parent=55 // loop_body
                %v736 = vld [vmem:[%s734] sm:$0xff]
                %737 = vst [vmem:[%s735] sm:$0xff] %v736
                %v738 = vld [vmem:[%s734 + $0x8] sm:$0xff]
                %739 = vst [vmem:[%s735 + $0x8] sm:$0xff] %v738
                %v740 = vld [vmem:[%s734 + $0x10] sm:$0xff]
                %741 = vst [vmem:[%s735 + $0x10] sm:$0xff] %v740
                %v742 = vld [vmem:[%s734 + $0x18] sm:$0xff]
                %743 = vst [vmem:[%s735 + $0x18] sm:$0xff] %v742
                %s744 = sadd.s32 1, %s733
                %p745 = scmp.ge.s32.totalorder %s744, %s726
                %s746 = scalar_select %p745, 0, %s744
                %s747 = smul.u32 %s746, 32
                %s748 = smul.u32 %s746, 32
                %s749 = scalar_lea.vmem %s706, %s747 [#allocation2]
                %s750 = scalar_lea.vmem %s717, %s748
              $region61: #{tpu_custom_call.1} parent=55 // loop_footer
                %s730 = sadd.s32 %s728, 1
              $region62: #{tpu_custom_call.1} parent=55 // loop_footer_branch
                %727 = sbr.rel target = $region58
              $region63: #{tpu_custom_call.1} parent=55 // loop_exit
                _
              %s751 = sshrl.u32 %s713, 2
              %s752 = sand.u32 %s713, 3
              %s753 = smul.u32 %s751, 4
              %s754 = smul.u32 8, %s753
              %s755 = scalar_lea.vmem %s706, %s754 [#allocation2]
              %s756 = smul.u32 8, %s753
              %s757 = scalar_lea.vmem %s717, %s756
              // While loop
              $region64: #{tpu_custom_call.1} parent=55 // loop_pre_header
                _
              $region65: #{tpu_custom_call.1} parent=55 // loop_header
                %s759 = sphi 0, %s761
                %p760 = scmp.ge.s32.totalorder %s759, %s752
                %s764 = sphi 0, %s771
                %s765 = sphi %s755, %s774
                %s766 = sphi %s757, %s775
              $region66: #{tpu_custom_call.1} parent=55 // loop_header_branch
                %763 = sbr.rel (%p760) target = $region70
              $region67: #{tpu_custom_call.1} parent=55 // loop_body
                %v767 = vld [vmem:[%s765] sm:$0xff]
                %768 = vst [vmem:[%s766] sm:$0xff] %v767
                %s769 = sadd.s32 1, %s764
                %p770 = scmp.ge.s32.totalorder %s769, %s752
                %s771 = scalar_select %p770, 0, %s769
                %s772 = smul.u32 %s771, 8
                %s773 = smul.u32 %s771, 8
                %s774 = scalar_lea.vmem %s755, %s772 [#allocation2]
                %s775 = scalar_lea.vmem %s757, %s773
              $region68: #{tpu_custom_call.1} parent=55 // loop_footer
                %s761 = sadd.s32 %s759, 1
              $region69: #{tpu_custom_call.1} parent=55 // loop_footer_branch
                %758 = sbr.rel target = $region65
              $region70: #{tpu_custom_call.1} parent=55 // loop_exit
                _
            $region56: #{tpu_custom_call.1} parent=47 // pred_fallthru
              _
          $region48: #{tpu_custom_call.1} parent=43 // pred_fallthru
            _
          %830 = vnop
        $region44: #{tpu_custom_call.1} parent=39 // pred_fallthru
          _
      $region40: #{tpu_custom_call.1} parent=5 // pred_fallthru
        _
      %p831 = scmp.le.s32.totalorder 2, %s11
      // Predicated region
      $region93: #{tpu_custom_call.1} parent=5 // pred_check
        %p832 = pneg %p831
      $region94: #{tpu_custom_call.1} parent=5 // pred_check_branch
        %834 = sbr.rel (%p832) target = $region96
      $region95: #{tpu_custom_call.1} parent=5 // pred_region
        %s835 = ssub.s32 %s11, 2
        // Predicated region
        $region97: #{tpu_custom_call.1} parent=95 // pred_check
          %p836 = pneg %p150
        $region98: #{tpu_custom_call.1} parent=95 // pred_check_branch
          %838 = sbr.rel (%p836) target = $region100
        $region99: #{tpu_custom_call.1} parent=95 // pred_region
          %s839 = sand.u32 %s135, 1
          %s840 = sand.u32 %s135, 1
          %s841 = smul.addr %s840, 32
          %s842 = scalar_lea.vmem [#allocation2], %s841
        $region100: #{tpu_custom_call.1} parent=95 // pred_fallthru
          _
      $region96: #{tpu_custom_call.1} parent=5 // pred_fallthru
        _
    $region6: #{tpu_custom_call.1} parent=1 // loop_footer
      %s15 = sadd.s32 1, %s11
    $region7: #{tpu_custom_call.1} parent=1 // loop_footer_branch
      %10 = sbr.rel target = $region3
    $region8: #{tpu_custom_call.1} parent=1 // loop_exit
      _

</llo_original>
